<compile_context>
chip_gen: v7x
topology: tpu7x:2x2x1
jax: 0.10.0
libtpu: 0.0.40
codegen_flags: <defaults>
</compile_context>

<pallas_src>
import functools

import jax
import jax.numpy as jnp
from jax.experimental import pallas as pl
from jax.experimental.pallas import tpu as pltpu


def _inception_fused_kernel(x_ref, w_ref, o_ref, *, H, W, N):
    # x_ref: (Cin_p, N*H*W)  channel-major activations, batch folded onto lanes;
    #                        row Cin is all-ones (bias carrier), remaining pad rows zero.
    # w_ref: (Cout, 9*Cin_p) fused tap weights (tap t = dh*3 + dw occupies columns
    #                        t*Cin_p .. t*Cin_p+Cin-1; 1x1 branch + bias live in tap 4).
    # o_ref: (N, Cout, H*W)  lane-dense output in native NCHW order.
    L = H * W
    NL = N * L
    x = x_ref[...]                                                  # (Cin_p, NL)

    # Row / column masks over the folded pixel axis.  They implement the conv zero
    # padding AND kill the circular-roll wrap-around / cross-image reads.
    idx = jax.lax.broadcasted_iota(jnp.int32, (1, NL), 1)
    pil = idx % L                                                   # pixel index in image
    col = idx % W
    not_top = pil >= W
    not_bot = pil < (L - W)
    not_left = col != 0
    not_right = col != (W - 1)

    blocks = []
    for dh in range(3):
        for dw in range(3):
            off = (dh - 1) * W + (dw - 1)                           # flat input offset
            if off == 0:
                blk = x                                             # centre tap: no shift
            else:
                # result[i] = x[(i + off) mod NL]  (wrap-around masked below)
                blk = pltpu.roll(x, (-off) % NL, axis=1)
            mask = None
            if dh == 0:
                mask = not_top
            elif dh == 2:
                mask = not_bot
            if dw == 0:
                mask = not_left if mask is None else (mask & not_left)
            elif dw == 2:
                mask = not_right if mask is None else (mask & not_right)
            if mask is not None:
                blk = jnp.where(mask, blk, 0.0)
            blocks.append(blk)

    slab = jnp.concatenate(blocks, axis=0)                          # (9*Cin_p, NL)
    y = jnp.dot(w_ref[...], slab, preferred_element_type=jnp.float32)   # (Cout, NL)
    y = jnp.maximum(y, 0.0)                                         # ReLU (bias already in)

    for n in range(N):                                              # lane-aligned slices
        o_ref[n] = y[:, n * L:(n + 1) * L].astype(o_ref.dtype)


@jax.jit
def inception_block(x_nchw, w1, b1, w2, b2):
    """InceptionBlock forward.

    x_nchw: (N, Cin, H, W) float32
    w1: (C1, Cin, 1, 1), b1: (C1,)   -- 1x1 branch (PyTorch OIHW layout)
    w2: (C2, Cin, 3, 3), b2: (C2,)   -- 3x3 branch (PyTorch OIHW layout)
    returns: (N, C1+C2, H, W)
    """
    N, Cin, H, W = x_nchw.shape
    C1, C2 = w1.shape[0], w2.shape[0]
    Cout = C1 + C2
    L = H * W
    NL = N * L
    Cin_p = ((Cin + 1 + 7) // 8) * 8          # sublane-aligned, with room for ones row

    # ---- activations: channel-major, batch folded onto lanes, + ones row for bias ----
    x_cm = jnp.transpose(x_nchw.reshape(N, Cin, L), (1, 0, 2)).reshape(Cin, NL)
    x_cm = x_cm.astype(jnp.float32)
    pad_rows = jnp.zeros((Cin_p - Cin, NL), jnp.float32).at[0].set(1.0)   # row Cin == 1.0
    x_in = jnp.concatenate([x_cm, pad_rows], axis=0)                      # (Cin_p, NL)

    # ---- fused weights (Cout, 9*Cin_p): 3x3 taps, 1x1 in centre tap, bias on ones row --
    wt = jnp.zeros((Cout, 9, Cin_p), jnp.float32)
    wt = wt.at[C1:, :, :Cin].set(
        jnp.transpose(w2.astype(jnp.float32), (0, 2, 3, 1)).reshape(C2, 9, Cin))
    wt = wt.at[:C1, 4, :Cin].set(w1[:, :, 0, 0].astype(jnp.float32))
    wt = wt.at[:C1, 4, Cin].set(b1.astype(jnp.float32))
    wt = wt.at[C1:, 4, Cin].set(b2.astype(jnp.float32))
    w_fused = wt.reshape(Cout, 9 * Cin_p)

    kernel = functools.partial(_inception_fused_kernel, H=H, W=W, N=N)
    out_flat = pl.pallas_call(
        kernel,
        out_shape=jax.ShapeDtypeStruct((N, Cout, L), x_nchw.dtype),
        grid_spec=pltpu.PrefetchScalarGridSpec(
            num_scalar_prefetch=0,
            grid=(1,),                                        # single step: whole batch
            in_specs=[
                pl.BlockSpec((Cin_p, NL), lambda i: (0, 0)),          # activations
                pl.BlockSpec((Cout, 9 * Cin_p), lambda i: (0, 0)),    # fused weights
            ],
            out_specs=pl.BlockSpec((N, Cout, L), lambda i: (0, 0, 0)),
        ),
        compiler_params=pltpu.CompilerParams(
            dimension_semantics=("arbitrary",),
        ),
    )(x_in, w_fused)

    # (N, Cout, H*W) -> (N, Cout, H, W): pure metadata reshape, already NCHW.
    return out_flat.reshape(N, Cout, H, W)


def _reference(x_nchw, w1, b1, w2, b2):
    """Pure-JAX reference (lax conv) for verification."""
    dn = jax.lax.conv_dimension_numbers(x_nchw.shape, w1.shape, ("NCHW", "OIHW", "NCHW"))
    y1 = jax.lax.conv_general_dilated(x_nchw, w1, (1, 1), "SAME", dimension_numbers=dn)
    y1 = jnp.maximum(y1 + b1.reshape(1, -1, 1, 1), 0.0)
    dn2 = jax.lax.conv_dimension_numbers(x_nchw.shape, w2.shape, ("NCHW", "OIHW", "NCHW"))
    y2 = jax.lax.conv_general_dilated(x_nchw, w2, (1, 1), "SAME", dimension_numbers=dn2)
    y2 = jnp.maximum(y2 + b2.reshape(1, -1, 1, 1), 0.0)
    return jnp.concatenate([y1, y2], axis=1)


if __name__ == "__main__":
    key = jax.random.PRNGKey(0)
    k_x, k_w1, k_b1, k_w2, k_b2 = jax.random.split(key, 5)

    N, Cin, H, W = 2, 4, 16, 16
    C1, C2 = 32, 32  # out_chan = [32, 32], ksizes = [1, 3]

    x = jax.random.normal(k_x, (N, Cin, H, W), dtype=jnp.float32)
    w1 = jax.random.normal(k_w1, (C1, Cin, 1, 1), dtype=jnp.float32) * 0.1
    b1 = jax.random.normal(k_b1, (C1,), dtype=jnp.float32) * 0.1
    w2 = jax.random.normal(k_w2, (C2, Cin, 3, 3), dtype=jnp.float32) * 0.1
    b2 = jax.random.normal(k_b2, (C2,), dtype=jnp.float32) * 0.1

    out = inception_block(x, w1, b1, w2, b2)
    out = jax.block_until_ready(out)

    ref = jax.block_until_ready(_reference(x, w1, b1, w2, b2))
    assert out.shape == (N, C1 + C2, H, W), out.shape
    assert jnp.allclose(out, ref, atol=1e-3, rtol=1e-3), "mismatch vs reference"

    print("KERNEL_OK")
</pallas_src>

<mosaic_0001>
module attributes {stable_mosaic.version = 11 : i64} {
  func.func @_inception_fused_kernel(%arg0: i32, %arg1: memref<8x512xf32, #tpu.memory_space<vmem>>, %arg2: memref<64x72xf32, #tpu.memory_space<vmem>>, %arg3: memref<2x64x256xf32, #tpu.memory_space<vmem>>) attributes {dimension_semantics = [#tpu.dimension_semantics<arbitrary>], iteration_bounds = array<i64: 1>, scalar_prefetch = 0 : i64, scratch_operands = 0 : i64, tpu.core_type = #tpu.core_type<tc>, window_params = [{pipeline_mode = #tpu.pipeline_mode<synchronous>, transform_indices = @transform_0, window_bounds = array<i64: 8, 512>}, {pipeline_mode = #tpu.pipeline_mode<synchronous>, transform_indices = @transform_1, window_bounds = array<i64: 64, 72>}, {pipeline_mode = #tpu.pipeline_mode<synchronous>, transform_indices = @transform_2, window_bounds = array<i64: 2, 64, 256>}]} {
    %c0 = arith.constant 0 : index
    %c0_0 = arith.constant 0 : index
    %0 = vector.load %arg1[%c0, %c0_0] : memref<8x512xf32, #tpu.memory_space<vmem>>, vector<8x512xf32>
    %1 = tpu.iota {dimensions = array<i32: 1>} : vector<1x512xi32>
    %c256_i32 = arith.constant 256 : i32
    %c0_i32 = arith.constant 0 : i32
    %2 = arith.cmpi eq, %c256_i32, %c0_i32 : i32
    %c1_i32 = arith.constant 1 : i32
    %3 = arith.select %2, %c1_i32, %c256_i32 : i32
    %4 = vector.broadcast %3 : i32 to vector<1x512xi32>
    %5 = arith.remsi %1, %4 : vector<1x512xi32>
    %c0_i32_1 = arith.constant 0 : i32
    %6 = vector.broadcast %c0_i32_1 : i32 to vector<1x512xi32>
    %7 = arith.cmpi ne, %5, %6 : vector<1x512xi32>
    %c0_i32_2 = arith.constant 0 : i32
    %8 = vector.broadcast %c0_i32_2 : i32 to vector<1x512xi32>
    %9 = arith.cmpi slt, %5, %8 : vector<1x512xi32>
    %c0_i32_3 = arith.constant 0 : i32
    %10 = arith.cmpi slt, %3, %c0_i32_3 : i32
    %11 = vector.broadcast %10 : i1 to vector<1x512xi1>
    %12 = vector.broadcast %11 : vector<1x512xi1> to vector<1x512xi1>
    %13 = arith.xori %9, %12 : vector<1x512xi1>
    %14 = arith.andi %13, %7 : vector<1x512xi1>
    %15 = vector.broadcast %3 : i32 to vector<1x512xi32>
    %16 = arith.addi %5, %15 : vector<1x512xi32>
    %17 = arith.select %14, %16, %5 : vector<1x512xi1>, vector<1x512xi32>
    %c16_i32 = arith.constant 16 : i32
    %c0_i32_4 = arith.constant 0 : i32
    %18 = arith.cmpi eq, %c16_i32, %c0_i32_4 : i32
    %c1_i32_5 = arith.constant 1 : i32
    %19 = arith.select %18, %c1_i32_5, %c16_i32 : i32
    %20 = vector.broadcast %19 : i32 to vector<1x512xi32>
    %21 = arith.remsi %1, %20 : vector<1x512xi32>
    %c0_i32_6 = arith.constant 0 : i32
    %22 = vector.broadcast %c0_i32_6 : i32 to vector<1x512xi32>
    %23 = arith.cmpi ne, %21, %22 : vector<1x512xi32>
    %c0_i32_7 = arith.constant 0 : i32
    %24 = vector.broadcast %c0_i32_7 : i32 to vector<1x512xi32>
    %25 = arith.cmpi slt, %21, %24 : vector<1x512xi32>
    %c0_i32_8 = arith.constant 0 : i32
    %26 = arith.cmpi slt, %19, %c0_i32_8 : i32
    %27 = vector.broadcast %26 : i1 to vector<1x512xi1>
    %28 = vector.broadcast %27 : vector<1x512xi1> to vector<1x512xi1>
    %29 = arith.xori %25, %28 : vector<1x512xi1>
    %30 = arith.andi %29, %23 : vector<1x512xi1>
    %31 = vector.broadcast %19 : i32 to vector<1x512xi32>
    %32 = arith.addi %21, %31 : vector<1x512xi32>
    %33 = arith.select %30, %32, %21 : vector<1x512xi1>, vector<1x512xi32>
    %c16_i32_9 = arith.constant 16 : i32
    %34 = vector.broadcast %c16_i32_9 : i32 to vector<1x512xi32>
    %35 = arith.cmpi sge, %17, %34 : vector<1x512xi32>
    %c240_i32 = arith.constant 240 : i32
    %36 = vector.broadcast %c240_i32 : i32 to vector<1x512xi32>
    %37 = arith.cmpi slt, %17, %36 : vector<1x512xi32>
    %c0_i32_10 = arith.constant 0 : i32
    %38 = vector.broadcast %c0_i32_10 : i32 to vector<1x512xi32>
    %39 = arith.cmpi ne, %33, %38 : vector<1x512xi32>
    %c15_i32 = arith.constant 15 : i32
    %40 = vector.broadcast %c15_i32 : i32 to vector<1x512xi32>
    %41 = arith.cmpi ne, %33, %40 : vector<1x512xi32>
    %c17_i32 = arith.constant 17 : i32
    %42 = tpu.dynamic_rotate %0 by %c17_i32 dim 1 : vector<8x512xf32>, i32 -> vector<8x512xf32>
    %43 = arith.andi %35, %39 : vector<1x512xi1>
    %cst = arith.constant 0.000000e+00 : f32
    %44 = vector.shape_cast %43 : vector<1x512xi1> to vector<1x512xi1>
    %45 = vector.broadcast %44 : vector<1x512xi1> to vector<8x512xi1>
    %46 = vector.broadcast %cst : f32 to vector<8x512xf32>
    %47 = arith.select %45, %42, %46 : vector<8x512xi1>, vector<8x512xf32>
    %c16_i32_11 = arith.constant 16 : i32
    %48 = tpu.dynamic_rotate %0 by %c16_i32_11 dim 1 : vector<8x512xf32>, i32 -> vector<8x512xf32>
    %cst_12 = arith.constant 0.000000e+00 : f32
    %49 = vector.shape_cast %35 : vector<1x512xi1> to vector<1x512xi1>
    %50 = vector.broadcast %49 : vector<1x512xi1> to vector<8x512xi1>
    %51 = vector.broadcast %cst_12 : f32 to vector<8x512xf32>
    %52 = arith.select %50, %48, %51 : vector<8x512xi1>, vector<8x512xf32>
    %c15_i32_13 = arith.constant 15 : i32
    %53 = tpu.dynamic_rotate %0 by %c15_i32_13 dim 1 : vector<8x512xf32>, i32 -> vector<8x512xf32>
    %54 = arith.andi %35, %41 : vector<1x512xi1>
    %cst_14 = arith.constant 0.000000e+00 : f32
    %55 = vector.shape_cast %54 : vector<1x512xi1> to vector<1x512xi1>
    %56 = vector.broadcast %55 : vector<1x512xi1> to vector<8x512xi1>
    %57 = vector.broadcast %cst_14 : f32 to vector<8x512xf32>
    %58 = arith.select %56, %53, %57 : vector<8x512xi1>, vector<8x512xf32>
    %c1_i32_15 = arith.constant 1 : i32
    %59 = tpu.dynamic_rotate %0 by %c1_i32_15 dim 1 : vector<8x512xf32>, i32 -> vector<8x512xf32>
    %cst_16 = arith.constant 0.000000e+00 : f32
    %60 = vector.shape_cast %39 : vector<1x512xi1> to vector<1x512xi1>
    %61 = vector.broadcast %60 : vector<1x512xi1> to vector<8x512xi1>
    %62 = vector.broadcast %cst_16 : f32 to vector<8x512xf32>
    %63 = arith.select %61, %59, %62 : vector<8x512xi1>, vector<8x512xf32>
    %c511_i32 = arith.constant 511 : i32
    %64 = tpu.dynamic_rotate %0 by %c511_i32 dim 1 : vector<8x512xf32>, i32 -> vector<8x512xf32>
    %cst_17 = arith.constant 0.000000e+00 : f32
    %65 = vector.shape_cast %41 : vector<1x512xi1> to vector<1x512xi1>
    %66 = vector.broadcast %65 : vector<1x512xi1> to vector<8x512xi1>
    %67 = vector.broadcast %cst_17 : f32 to vector<8x512xf32>
    %68 = arith.select %66, %64, %67 : vector<8x512xi1>, vector<8x512xf32>
    %c497_i32 = arith.constant 497 : i32
    %69 = tpu.dynamic_rotate %0 by %c497_i32 dim 1 : vector<8x512xf32>, i32 -> vector<8x512xf32>
    %70 = arith.andi %37, %39 : vector<1x512xi1>
    %cst_18 = arith.constant 0.000000e+00 : f32
    %71 = vector.shape_cast %70 : vector<1x512xi1> to vector<1x512xi1>
    %72 = vector.broadcast %71 : vector<1x512xi1> to vector<8x512xi1>
    %73 = vector.broadcast %cst_18 : f32 to vector<8x512xf32>
    %74 = arith.select %72, %69, %73 : vector<8x512xi1>, vector<8x512xf32>
    %c496_i32 = arith.constant 496 : i32
    %75 = tpu.dynamic_rotate %0 by %c496_i32 dim 1 : vector<8x512xf32>, i32 -> vector<8x512xf32>
    %cst_19 = arith.constant 0.000000e+00 : f32
    %76 = vector.shape_cast %37 : vector<1x512xi1> to vector<1x512xi1>
    %77 = vector.broadcast %76 : vector<1x512xi1> to vector<8x512xi1>
    %78 = vector.broadcast %cst_19 : f32 to vector<8x512xf32>
    %79 = arith.select %77, %75, %78 : vector<8x512xi1>, vector<8x512xf32>
    %c495_i32 = arith.constant 495 : i32
    %80 = tpu.dynamic_rotate %0 by %c495_i32 dim 1 : vector<8x512xf32>, i32 -> vector<8x512xf32>
    %81 = arith.andi %37, %41 : vector<1x512xi1>
    %cst_20 = arith.constant 0.000000e+00 : f32
    %82 = vector.shape_cast %81 : vector<1x512xi1> to vector<1x512xi1>
    %83 = vector.broadcast %82 : vector<1x512xi1> to vector<8x512xi1>
    %84 = vector.broadcast %cst_20 : f32 to vector<8x512xf32>
    %85 = arith.select %83, %80, %84 : vector<8x512xi1>, vector<8x512xf32>
    %86 = tpu.concatenate %47, %52, %58, %63, %0, %68, %74, %79, %85 in 0 : vector<8x512xf32>, vector<8x512xf32>, vector<8x512xf32>, vector<8x512xf32>, vector<8x512xf32>, vector<8x512xf32>, vector<8x512xf32>, vector<8x512xf32>, vector<8x512xf32> -> vector<72x512xf32>
    %c0_21 = arith.constant 0 : index
    %c0_22 = arith.constant 0 : index
    %87 = vector.load %arg2[%c0_21, %c0_22] : memref<64x72xf32, #tpu.memory_space<vmem>>, vector<64x72xf32>
    %cst_23 = arith.constant dense<0.000000e+00> : vector<64x512xf32>
    %88 = tpu.matmul %87, %86, %cst_23 {dimension_numbers = #tpu.dot_dimension_numbers<[1], [0], [0], [1], [0, 0, 1, 1], [], []>} : vector<64x72xf32>, vector<72x512xf32>, vector<64x512xf32> -> vector<64x512xf32>
    %cst_24 = arith.constant 0.000000e+00 : f32
    %89 = vector.broadcast %cst_24 : f32 to vector<64x512xf32>
    %90 = arith.maximumf %88, %89 : vector<64x512xf32>
    %91 = vector.extract_strided_slice %90 {offsets = [0, 0], sizes = [64, 256], strides = [1, 1]} : vector<64x512xf32> to vector<64x256xf32>
    %c0_25 = arith.constant 0 : index
    %c0_26 = arith.constant 0 : index
    %c0_27 = arith.constant 0 : index
    %92 = vector.load %arg3[%c0_25, %c0_26, %c0_27] : memref<2x64x256xf32, #tpu.memory_space<vmem>>, vector<1x64x256xf32>
    %93 = vector.shape_cast %92 : vector<1x64x256xf32> to vector<64x256xf32>
    %94 = vector.shape_cast %91 : vector<64x256xf32> to vector<1x64x256xf32>
    tpu.vector_store %arg3[%c0_25, %c0_26, %c0_27], %94 {strides = array<i32>} : memref<2x64x256xf32, #tpu.memory_space<vmem>>, vector<1x64x256xf32>,
    %95 = vector.extract_strided_slice %90 {offsets = [0, 256], sizes = [64, 256], strides = [1, 1]} : vector<64x512xf32> to vector<64x256xf32>
    %c1 = arith.constant 1 : index
    %c0_28 = arith.constant 0 : index
    %c0_29 = arith.constant 0 : index
    %96 = vector.load %arg3[%c1, %c0_28, %c0_29] : memref<2x64x256xf32, #tpu.memory_space<vmem>>, vector<1x64x256xf32>
    %97 = vector.shape_cast %96 : vector<1x64x256xf32> to vector<64x256xf32>
    %98 = vector.shape_cast %95 : vector<64x256xf32> to vector<1x64x256xf32>
    tpu.vector_store %arg3[%c1, %c0_28, %c0_29], %98 {strides = array<i32>} : memref<2x64x256xf32, #tpu.memory_space<vmem>>, vector<1x64x256xf32>,
    return
  }
  func.func @transform_0(%arg0: i32) -> (i32, i32) {
    %c0_i32 = arith.constant 0 : i32
    %c0_i32_0 = arith.constant 0 : i32
    %c0_i32_1 = arith.constant 0 : i32
    return %c0_i32, %c0_i32_0 : i32, i32
  }
  func.func @transform_1(%arg0: i32) -> (i32, i32) {
    %c0_i32 = arith.constant 0 : i32
    %c0_i32_0 = arith.constant 0 : i32
    %c0_i32_1 = arith.constant 0 : i32
    return %c0_i32, %c0_i32_0 : i32, i32
  }
  func.func @transform_2(%arg0: i32) -> (i32, i32, i32) {
    %c0_i32 = arith.constant 0 : i32
    %c0_i32_0 = arith.constant 0 : i32
    %c0_i32_1 = arith.constant 0 : i32
    %c0_i32_2 = arith.constant 0 : i32
    return %c0_i32, %c0_i32_0, %c0_i32_1 : i32, i32, i32
  }
}

</mosaic_0001>

<llo_original>
// kernel: inception_block.1
$region0: #{inception_block.1}
  #allocation0 [shape = 'u32[]', space=smem, size = 0x4, offset = 0x4, fixed_abs, tag = 'smem constant byte address 0x4 - core index']
  #allocation1 [shape = 'u32[144,128]{1,0:T(1,128)}', space=vmem, size = 0x12000, scoped, tag = 'internal scratch']
  %s0 = inlined_call_operand.vmem [shape: f32[8,512], index: 0, kind: input, shape index: {}]
  %s1 = inlined_call_operand.vmem [shape: f32[64,72], index: 1, kind: input, shape index: {}]
  %s2 = inlined_call_operand.vmem [shape: f32[2,64,256], index: 2, kind: output, shape index: {}]
  %s3 = sld [smem:[#allocation0]]
  $region18: #{inception_block.1} parent=0
    _
  %s5 = ssub.s32 1, %s3
  %s6 = scalar_select 0, %s5, %s3
  // Predicated region
  $region2: #{inception_block.1} parent=0 // pred_check
    _
  $region3: #{inception_block.1} parent=0 // pred_check_branch
    %8 = sbr.rel (0) target = $region5
  $region4: #{inception_block.1} parent=0 // pred_region
    _
  $region5: #{inception_block.1} parent=0 // pred_fallthru
    _
  // Predicated region
  $region6: #{inception_block.1} parent=0 // pred_check
    _
  $region7: #{inception_block.1} parent=0 // pred_check_branch
    %10 = sbr.rel (0) target = $region9
  $region8: #{inception_block.1} parent=0 // pred_region
    _
  $region9: #{inception_block.1} parent=0 // pred_fallthru
    _
  %v11 = vld [vmem:[%s0] sm:$0xff]
  %v12 = vld [vmem:[%s0 + $0x8] sm:$0xff]
  %v13 = vld [vmem:[%s0 + $0x10] sm:$0xff]
  %v14 = vld [vmem:[%s0 + $0x18] sm:$0xff]
  %v15 = vlaneseq
  %v16 = vand.u32 %v15, 127
  %v17 = vadd.s32 %v16, 128
  %v18 = vadd.s32 %v16, 256
  %v19 = vadd.s32 %v16, 384
  %vm20 = vcmp.lt.s32.totalorder %v16, 0
  %v21 = vsub.s32 0, %v16
  %v22 = vsel %vm20, %v21, %v16
  %v23 = vshrl.u32 %v22, 8
  %v24 = vand.u32 %v22, 255
  %v25 = vsub.s32 0, %v24
  %v26 = vsel %vm20, %v25, %v24
  %vm27 = vcmp.lt.s32.totalorder %v17, 0
  %v28 = vsub.s32 0, %v17
  %v29 = vsel %vm27, %v28, %v17
  %v30 = vshrl.u32 %v29, 8
  %v31 = vand.u32 %v29, 255
  %v32 = vsub.s32 0, %v31
  %v33 = vsel %vm27, %v32, %v31
  %vm34 = vcmp.lt.s32.totalorder %v18, 0
  %v35 = vsub.s32 0, %v18
  %v36 = vsel %vm34, %v35, %v18
  %v37 = vshrl.u32 %v36, 8
  %v38 = vand.u32 %v36, 255
  %v39 = vsub.s32 0, %v38
  %v40 = vsel %vm34, %v39, %v38
  %vm41 = vcmp.lt.s32.totalorder %v19, 0
  %v42 = vsub.s32 0, %v19
  %v43 = vsel %vm41, %v42, %v19
  %v44 = vshrl.u32 %v43, 8
  %v45 = vand.u32 %v43, 255
  %v46 = vsub.s32 0, %v45
  %v47 = vsel %vm41, %v46, %v45
  %vm48 = vcmp.ne.s32.totalorder %v26, 0
  %vm49 = vcmp.ne.s32.totalorder %v33, 0
  %vm50 = vcmp.ne.s32.totalorder %v40, 0
  %vm51 = vcmp.ne.s32.totalorder %v47, 0
  %vm52 = vcmp.lt.s32.totalorder %v26, 0
  %vm53 = vcmp.lt.s32.totalorder %v33, 0
  %vm54 = vcmp.lt.s32.totalorder %v40, 0
  %vm55 = vcmp.lt.s32.totalorder %v47, 0
  %vm56 = vmand %vm52, %vm48
  %vm57 = vmand %vm53, %vm49
  %vm58 = vmand %vm54, %vm50
  %vm59 = vmand %vm55, %vm51
  %v60 = vadd.s32 %v26, 256
  %v61 = vadd.s32 %v33, 256
  %v62 = vadd.s32 %v40, 256
  %v63 = vadd.s32 %v47, 256
  %v64 = vsel %vm56, %v60, %v26
  %v65 = vsel %vm57, %v61, %v33
  %v66 = vsel %vm58, %v62, %v40
  %v67 = vsel %vm59, %v63, %v47
  %vm68 = vcmp.lt.s32.totalorder %v16, 0
  %v69 = vsub.s32 0, %v16
  %v70 = vsel %vm68, %v69, %v16
  %v71 = vshrl.u32 %v70, 4
  %v72 = vand.u32 %v70, 15
  %v73 = vsub.s32 0, %v72
  %v74 = vsel %vm68, %v73, %v72
  %vm75 = vcmp.lt.s32.totalorder %v17, 0
  %v76 = vsub.s32 0, %v17
  %v77 = vsel %vm75, %v76, %v17
  %v78 = vshrl.u32 %v77, 4
  %v79 = vand.u32 %v77, 15
  %v80 = vsub.s32 0, %v79
  %v81 = vsel %vm75, %v80, %v79
  %vm82 = vcmp.lt.s32.totalorder %v18, 0
  %v83 = vsub.s32 0, %v18
  %v84 = vsel %vm82, %v83, %v18
  %v85 = vshrl.u32 %v84, 4
  %v86 = vand.u32 %v84, 15
  %v87 = vsub.s32 0, %v86
  %v88 = vsel %vm82, %v87, %v86
  %vm89 = vcmp.lt.s32.totalorder %v19, 0
  %v90 = vsub.s32 0, %v19
  %v91 = vsel %vm89, %v90, %v19
  %v92 = vshrl.u32 %v91, 4
  %v93 = vand.u32 %v91, 15
  %v94 = vsub.s32 0, %v93
  %v95 = vsel %vm89, %v94, %v93
  %vm96 = vcmp.ne.s32.totalorder %v74, 0
  %vm97 = vcmp.ne.s32.totalorder %v81, 0
  %vm98 = vcmp.ne.s32.totalorder %v88, 0
  %vm99 = vcmp.ne.s32.totalorder %v95, 0
  %vm100 = vcmp.lt.s32.totalorder %v74, 0
  %vm101 = vcmp.lt.s32.totalorder %v81, 0
  %vm102 = vcmp.lt.s32.totalorder %v88, 0
  %vm103 = vcmp.lt.s32.totalorder %v95, 0
  %vm104 = vmand %vm100, %vm96
  %vm105 = vmand %vm101, %vm97
  %vm106 = vmand %vm102, %vm98
  %vm107 = vmand %vm103, %vm99
  %v108 = vadd.s32 %v74, 16
  %v109 = vadd.s32 %v81, 16
  %v110 = vadd.s32 %v88, 16
  %v111 = vadd.s32 %v95, 16
  %v112 = vsel %vm104, %v108, %v74
  %v113 = vsel %vm105, %v109, %v81
  %v114 = vsel %vm106, %v110, %v88
  %v115 = vsel %vm107, %v111, %v95
  %vm116 = vcmp.ge.s32.totalorder %v64, 16
  %vm117 = vcmp.ge.s32.totalorder %v65, 16
  %vm118 = vcmp.ge.s32.totalorder %v66, 16
  %vm119 = vcmp.ge.s32.totalorder %v67, 16
  %vm120 = vcmp.lt.s32.totalorder %v64, 240
  %vm121 = vcmp.lt.s32.totalorder %v65, 240
  %vm122 = vcmp.lt.s32.totalorder %v66, 240
  %vm123 = vcmp.lt.s32.totalorder %v67, 240
  %vm124 = vcmp.ne.s32.totalorder %v112, 0
  %vm125 = vcmp.ne.s32.totalorder %v113, 0
  %vm126 = vcmp.ne.s32.totalorder %v114, 0
  %vm127 = vcmp.ne.s32.totalorder %v115, 0
  %vm128 = vcmp.ne.s32.totalorder %v112, 15
  %vm129 = vcmp.ne.s32.totalorder %v113, 15
  %vm130 = vcmp.ne.s32.totalorder %v114, 15
  %vm131 = vcmp.ne.s32.totalorder %v115, 15
  %132 = vrot.lane.b32.xlu0 %v11, 17
  %v133 = vpop.permute.xlu0 %132
  %134 = vrot.lane.b32.xlu0 %v12, 17
  %v135 = vpop.permute.xlu0 %134
  %136 = vrot.lane.b32.xlu0 %v13, 17
  %v137 = vpop.permute.xlu0 %136
  %138 = vrot.lane.b32.xlu0 %v14, 17
  %v139 = vpop.permute.xlu0 %138
  %vm140 = vcmp.lt.s32.totalorder %v16, 17
  %v141 = vsel %vm140, %v137, %v139
  %v142 = vsel %vm140, %v135, %v137
  %v143 = vsel %vm140, %v133, %v135
  %v144 = vsel %vm140, %v139, %v133
  %vm145 = vmand %vm116, %vm124
  %vm146 = vmand %vm117, %vm125
  %vm147 = vmand %vm118, %vm126
  %vm148 = vmand %vm119, %vm127
  %v149 = vsel %vm145, 1, 0
  %v150 = vsel %vm146, 1, 0
  %v151 = vsel %vm147, 1, 0
  %v152 = vsel %vm148, 1, 0
  %vm153 = vcmp.eq.s32.totalorder %v149, 1
  %vm154 = vcmp.eq.s32.totalorder %v150, 1
  %vm155 = vcmp.eq.s32.totalorder %v151, 1
  %vm156 = vcmp.eq.s32.totalorder %v152, 1
  %v157 = vsel %vm153, %v144, 0.0
  %v158 = vsel %vm154, %v143, 0.0
  %v159 = vsel %vm155, %v142, 0.0
  %v160 = vsel %vm156, %v141, 0.0
  %161 = vrot.lane.b32.xlu0 %v11, 16
  %v162 = vpop.permute.xlu0 %161
  %163 = vrot.lane.b32.xlu0 %v12, 16
  %v164 = vpop.permute.xlu0 %163
  %165 = vrot.lane.b32.xlu0 %v13, 16
  %v166 = vpop.permute.xlu0 %165
  %167 = vrot.lane.b32.xlu0 %v14, 16
  %v168 = vpop.permute.xlu0 %167
  %vm169 = vcmp.lt.s32.totalorder %v16, 16
  %v170 = vsel %vm169, %v166, %v168
  %v171 = vsel %vm169, %v164, %v166
  %v172 = vsel %vm169, %v162, %v164
  %v173 = vsel %vm169, %v168, %v162
  %v174 = vsel %vm116, 1, 0
  %v175 = vsel %vm117, 1, 0
  %v176 = vsel %vm118, 1, 0
  %v177 = vsel %vm119, 1, 0
  %vm178 = vcmp.eq.s32.totalorder %v174, 1
  %vm179 = vcmp.eq.s32.totalorder %v175, 1
  %vm180 = vcmp.eq.s32.totalorder %v176, 1
  %vm181 = vcmp.eq.s32.totalorder %v177, 1
  %v182 = vsel %vm178, %v173, 0.0
  %v183 = vsel %vm179, %v172, 0.0
  %v184 = vsel %vm180, %v171, 0.0
  %v185 = vsel %vm181, %v170, 0.0
  %186 = vrot.lane.b32.xlu0 %v11, 15
  %v187 = vpop.permute.xlu0 %186
  %188 = vrot.lane.b32.xlu0 %v12, 15
  %v189 = vpop.permute.xlu0 %188
  %190 = vrot.lane.b32.xlu0 %v13, 15
  %v191 = vpop.permute.xlu0 %190
  %192 = vrot.lane.b32.xlu0 %v14, 15
  %v193 = vpop.permute.xlu0 %192
  %vm194 = vcmp.lt.s32.totalorder %v16, 15
  %v195 = vsel %vm194, %v191, %v193
  %v196 = vsel %vm194, %v189, %v191
  %v197 = vsel %vm194, %v187, %v189
  %v198 = vsel %vm194, %v193, %v187
  %vm199 = vmand %vm116, %vm128
  %vm200 = vmand %vm117, %vm129
  %vm201 = vmand %vm118, %vm130
  %vm202 = vmand %vm119, %vm131
  %v203 = vsel %vm199, 1, 0
  %v204 = vsel %vm200, 1, 0
  %v205 = vsel %vm201, 1, 0
  %v206 = vsel %vm202, 1, 0
  %vm207 = vcmp.eq.s32.totalorder %v203, 1
  %vm208 = vcmp.eq.s32.totalorder %v204, 1
  %vm209 = vcmp.eq.s32.totalorder %v205, 1
  %vm210 = vcmp.eq.s32.totalorder %v206, 1
  %v211 = vsel %vm207, %v198, 0.0
  %v212 = vsel %vm208, %v197, 0.0
  %v213 = vsel %vm209, %v196, 0.0
  %v214 = vsel %vm210, %v195, 0.0
  %215 = vrot.lane.b32.xlu0 %v11, 1
  %v216 = vpop.permute.xlu0 %215
  %217 = vrot.lane.b32.xlu0 %v12, 1
  %v218 = vpop.permute.xlu0 %217
  %219 = vrot.lane.b32.xlu0 %v13, 1
  %v220 = vpop.permute.xlu0 %219
  %221 = vrot.lane.b32.xlu0 %v14, 1
  %v222 = vpop.permute.xlu0 %221
  %vm223 = vcmp.lt.s32.totalorder %v16, 1
  %v224 = vsel %vm223, %v220, %v222
  %v225 = vsel %vm223, %v218, %v220
  %v226 = vsel %vm223, %v216, %v218
  %v227 = vsel %vm223, %v222, %v216
  %v228 = vsel %vm124, 1, 0
  %v229 = vsel %vm125, 1, 0
  %v230 = vsel %vm126, 1, 0
  %v231 = vsel %vm127, 1, 0
  %vm232 = vcmp.eq.s32.totalorder %v228, 1
  %vm233 = vcmp.eq.s32.totalorder %v229, 1
  %vm234 = vcmp.eq.s32.totalorder %v230, 1
  %vm235 = vcmp.eq.s32.totalorder %v231, 1
  %v236 = vsel %vm232, %v227, 0.0
  %v237 = vsel %vm233, %v226, 0.0
  %v238 = vsel %vm234, %v225, 0.0
  %v239 = vsel %vm235, %v224, 0.0
  %240 = vrot.lane.b32.xlu0 %v11, 127
  %v241 = vpop.permute.xlu0 %240
  %242 = vrot.lane.b32.xlu0 %v12, 127
  %v243 = vpop.permute.xlu0 %242
  %244 = vrot.lane.b32.xlu0 %v13, 127
  %v245 = vpop.permute.xlu0 %244
  %246 = vrot.lane.b32.xlu0 %v14, 127
  %v247 = vpop.permute.xlu0 %246
  %vm248 = vcmp.lt.s32.totalorder %v16, 127
  %v249 = vsel %vm248, %v245, %v247
  %v250 = vsel %vm248, %v243, %v245
  %v251 = vsel %vm248, %v241, %v243
  %v252 = vsel %vm248, %v247, %v241
  %v253 = vsel %vm128, 1, 0
  %v254 = vsel %vm129, 1, 0
  %v255 = vsel %vm130, 1, 0
  %v256 = vsel %vm131, 1, 0
  %vm257 = vcmp.eq.s32.totalorder %v253, 1
  %vm258 = vcmp.eq.s32.totalorder %v254, 1
  %vm259 = vcmp.eq.s32.totalorder %v255, 1
  %vm260 = vcmp.eq.s32.totalorder %v256, 1
  %v261 = vsel %vm257, %v251, 0.0
  %v262 = vsel %vm258, %v250, 0.0
  %v263 = vsel %vm259, %v249, 0.0
  %v264 = vsel %vm260, %v252, 0.0
  %265 = vrot.lane.b32.xlu0 %v11, 113
  %v266 = vpop.permute.xlu0 %265
  %267 = vrot.lane.b32.xlu0 %v12, 113
  %v268 = vpop.permute.xlu0 %267
  %269 = vrot.lane.b32.xlu0 %v13, 113
  %v270 = vpop.permute.xlu0 %269
  %271 = vrot.lane.b32.xlu0 %v14, 113
  %v272 = vpop.permute.xlu0 %271
  %vm273 = vcmp.lt.s32.totalorder %v16, 113
  %v274 = vsel %vm273, %v270, %v272
  %v275 = vsel %vm273, %v268, %v270
  %v276 = vsel %vm273, %v266, %v268
  %v277 = vsel %vm273, %v272, %v266
  %vm278 = vmand %vm120, %vm124
  %vm279 = vmand %vm121, %vm125
  %vm280 = vmand %vm122, %vm126
  %vm281 = vmand %vm123, %vm127
  %v282 = vsel %vm278, 1, 0
  %v283 = vsel %vm279, 1, 0
  %v284 = vsel %vm280, 1, 0
  %v285 = vsel %vm281, 1, 0
  %vm286 = vcmp.eq.s32.totalorder %v282, 1
  %vm287 = vcmp.eq.s32.totalorder %v283, 1
  %vm288 = vcmp.eq.s32.totalorder %v284, 1
  %vm289 = vcmp.eq.s32.totalorder %v285, 1
  %v290 = vsel %vm286, %v276, 0.0
  %v291 = vsel %vm287, %v275, 0.0
  %v292 = vsel %vm288, %v274, 0.0
  %v293 = vsel %vm289, %v277, 0.0
  %294 = vrot.lane.b32.xlu0 %v11, 112
  %v295 = vpop.permute.xlu0 %294
  %296 = vrot.lane.b32.xlu0 %v12, 112
  %v297 = vpop.permute.xlu0 %296
  %298 = vrot.lane.b32.xlu0 %v13, 112
  %v299 = vpop.permute.xlu0 %298
  %300 = vrot.lane.b32.xlu0 %v14, 112
  %v301 = vpop.permute.xlu0 %300
  %vm302 = vcmp.lt.s32.totalorder %v16, 112
  %v303 = vsel %vm302, %v299, %v301
  %v304 = vsel %vm302, %v297, %v299
  %v305 = vsel %vm302, %v295, %v297
  %v306 = vsel %vm302, %v301, %v295
  %v307 = vsel %vm120, 1, 0
  %v308 = vsel %vm121, 1, 0
  %v309 = vsel %vm122, 1, 0
  %v310 = vsel %vm123, 1, 0
  %vm311 = vcmp.eq.s32.totalorder %v307, 1
  %vm312 = vcmp.eq.s32.totalorder %v308, 1
  %vm313 = vcmp.eq.s32.totalorder %v309, 1
  %vm314 = vcmp.eq.s32.totalorder %v310, 1
  %v315 = vsel %vm311, %v305, 0.0
  %v316 = vsel %vm312, %v304, 0.0
  %v317 = vsel %vm313, %v303, 0.0
  %v318 = vsel %vm314, %v306, 0.0
  %319 = vrot.lane.b32.xlu0 %v11, 111
  %v320 = vpop.permute.xlu0 %319
  %321 = vrot.lane.b32.xlu0 %v12, 111
  %v322 = vpop.permute.xlu0 %321
  %323 = vrot.lane.b32.xlu0 %v13, 111
  %v324 = vpop.permute.xlu0 %323
  %325 = vrot.lane.b32.xlu0 %v14, 111
  %v326 = vpop.permute.xlu0 %325
  %vm327 = vcmp.lt.s32.totalorder %v16, 111
  %v328 = vsel %vm327, %v324, %v326
  %v329 = vsel %vm327, %v322, %v324
  %v330 = vsel %vm327, %v320, %v322
  %v331 = vsel %vm327, %v326, %v320
  %vm332 = vmand %vm120, %vm128
  %vm333 = vmand %vm121, %vm129
  %vm334 = vmand %vm122, %vm130
  %vm335 = vmand %vm123, %vm131
  %v336 = vsel %vm332, 1, 0
  %v337 = vsel %vm333, 1, 0
  %v338 = vsel %vm334, 1, 0
  %v339 = vsel %vm335, 1, 0
  %vm340 = vcmp.eq.s32.totalorder %v336, 1
  %vm341 = vcmp.eq.s32.totalorder %v337, 1
  %vm342 = vcmp.eq.s32.totalorder %v338, 1
  %vm343 = vcmp.eq.s32.totalorder %v339, 1
  %v344 = vsel %vm340, %v330, 0.0
  %v345 = vsel %vm341, %v329, 0.0
  %v346 = vsel %vm342, %v328, 0.0
  %v347 = vsel %vm343, %v331, 0.0
  %v348 = vld [vmem:[%s1] sm:$0xff]
  %v349 = vld [vmem:[%s1 + $0x8] sm:$0xff]
  %v350 = vld [vmem:[%s1 + $0x10] sm:$0xff]
  %v351 = vld [vmem:[%s1 + $0x18] sm:$0xff]
  %v352 = vld [vmem:[%s1 + $0x20] sm:$0xff]
  %v353 = vld [vmem:[%s1 + $0x28] sm:$0xff]
  %v354 = vld [vmem:[%s1 + $0x30] sm:$0xff]
  %v355 = vld [vmem:[%s1 + $0x38] sm:$0xff]
  %vm356 = vcmask 588800
  %v358 = vsel %vm356, %v348, 0
  %v361 = vsel %vm356, %v349, 0
  %v364 = vsel %vm356, %v350, 0
  %v367 = vsel %vm356, %v351, 0
  %v370 = vsel %vm356, %v352, 0
  %v373 = vsel %vm356, %v353, 0
  %v376 = vsel %vm356, %v354, 0
  %v379 = vsel %vm356, %v355, 0
  %381 = vmatprep.subr.mxu0 %v158
  %382 = vmatpush1.msra.mxu0 %v157
  %383 = vmatprep.subr.mxu0 %v183
  %384 = vmatpush1.msra.mxu0 %v182
  %385 = vmatprep.subr.mxu0 %v212
  %386 = vmatpush1.msra.mxu0 %v211
  %387 = vmatprep.subr.mxu0 %v237
  %388 = vmatpush1.msra.mxu0 %v236
  %389 = vmatprep.subr.mxu0 %v12
  %390 = vmatpush1.msra.mxu0 %v11
  %391 = vmatprep.subr.mxu0 %v262
  %392 = vmatpush1.msra.mxu0 %v261
  %393 = vmatprep.subr.mxu0 %v291
  %394 = vmatpush1.msra.mxu0 %v290
  %395 = vmatprep.subr.mxu0 %v316
  %396 = vmatpush1.msra.mxu0 %v315
  %397 = vmatprep.subr.mxu0 %v345
  %398 = vmatpush1.msra.mxu0 %v344
  %399 = vmatprep.subr.mxu0 0.0
  %400 = vmatpush1.msra.mxu0 0.0
  %401 = vmatprep.subr.mxu0 0.0
  %402 = vmatpush1.msra.mxu0 0.0
  %403 = vmatprep.subr.mxu0 0.0
  %404 = vmatpush1.msra.mxu0 0.0
  %405 = vmatprep.subr.mxu0 0.0
  %406 = vmatpush1.msra.mxu0 0.0
  %407 = vmatprep.subr.mxu0 0.0
  %408 = vmatpush1.msra.mxu0 0.0
  %409 = vmatprep.subr.mxu0 0.0
  %410 = vmatpush1.msra.mxu0 0.0
  %411 = vmatprep.subr.mxu0 0.0
  %412 = vmatpush1.msra.mxu0 0.0
  %413 = vmatprep.subr.mxu0 0.0
  %414 = vmatpush1.msra.mxu0 0.0
  %415 = vmatprep.subr.mxu0 0.0
  %416 = vmatpush1.msra.mxu0 0.0
  %417 = vmatprep.subr.mxu0 0.0
  %418 = vmatpush1.msra.mxu0 0.0
  %419 = vmatprep.subr.mxu0 0.0
  %420 = vmatpush1.msra.mxu0 0.0
  %421 = vmatprep.subr.mxu0 0.0
  %422 = vmatpush1.msra.mxu0 0.0
  %423 = vmatprep.subr.mxu0 0.0
  %424 = vmatpush1.msra.mxu0 0.0
  %425 = vmatprep.subr.mxu0 0.0
  %426 = vmatpush1.msra.mxu0 0.0
  %427 = vmatprep.subr.mxu0 0.0
  %428 = vmatpush1.msra.mxu0 0.0
  %429 = vmatprep.subr.mxu0 0.0
  %430 = vmatpush1.msra.mxu0 0.0
  %431 = vmatprep.subr.mxu0 0.0
  %432 = vmatpush1.msra.mxu0 0.0
  %433 = vmatprep.subr.mxu0 0.0
  %434 = vmatpush1.msra.mxu0 0.0
  %435 = vmatprep.subr.mxu0 0.0
  %436 = vmatpush1.msra.mxu0 0.0
  %437 = vmatprep.subr.mxu0 0.0
  %438 = vmatpush1.msra.mxu0 0.0
  %439 = vmatprep.subr.mxu0 0.0
  %440 = vmatpush1.msra.mxu0 0.0
  %441 = vmatprep.subr.mxu0 0.0
  %442 = vmatpush1.msra.mxu0 0.0
  %443 = vmatprep.subr.mxu0 0.0
  %444 = vmatpush1.msra.mxu0 0.0
  %445 = vmatprep.mubr.f32.mxu0 0.0
  %446 = vmatmul.mubr.f32.gmra.mrb[0].mxu0 %v358
  %v447 = vpop.f32.mrb[0].mxu0
  %v448 = vadd.f32 0.0, %v447
  %v449 = vpop.f32.mrb[0].mxu0
  %v450 = vadd.f32 0.0, %v449
  %451 = vmatprep.mubr.f32.mxu0 0.0
  %452 = vmatmul.mubr.f32.gmra.mrb[0].mxu0 %v361
  %v453 = vpop.f32.mrb[0].mxu0
  %v454 = vadd.f32 0.0, %v453
  %v455 = vpop.f32.mrb[0].mxu0
  %v456 = vadd.f32 0.0, %v455
  %457 = vmatprep.mubr.f32.mxu0 0.0
  %458 = vmatmul.mubr.f32.gmra.mrb[0].mxu0 %v364
  %v459 = vpop.f32.mrb[0].mxu0
  %v460 = vadd.f32 0.0, %v459
  %v461 = vpop.f32.mrb[0].mxu0
  %v462 = vadd.f32 0.0, %v461
  %463 = vmatprep.mubr.f32.mxu0 0.0
  %464 = vmatmul.mubr.f32.gmra.mrb[0].mxu0 %v367
  %v465 = vpop.f32.mrb[0].mxu0
  %v466 = vadd.f32 0.0, %v465
  %v467 = vpop.f32.mrb[0].mxu0
  %v468 = vadd.f32 0.0, %v467
  %469 = vmatprep.mubr.f32.mxu0 0.0
  %470 = vmatmul.mubr.f32.gmra.mrb[0].mxu0 %v370
  %v471 = vpop.f32.mrb[0].mxu0
  %v472 = vadd.f32 0.0, %v471
  %v473 = vpop.f32.mrb[0].mxu0
  %v474 = vadd.f32 0.0, %v473
  %475 = vmatprep.mubr.f32.mxu0 0.0
  %476 = vmatmul.mubr.f32.gmra.mrb[0].mxu0 %v373
  %v477 = vpop.f32.mrb[0].mxu0
  %v478 = vadd.f32 0.0, %v477
  %v479 = vpop.f32.mrb[0].mxu0
  %v480 = vadd.f32 0.0, %v479
  %481 = vmatprep.mubr.f32.mxu0 0.0
  %482 = vmatmul.mubr.f32.gmra.mrb[0].mxu0 %v376
  %v483 = vpop.f32.mrb[0].mxu0
  %v484 = vadd.f32 0.0, %v483
  %v485 = vpop.f32.mrb[0].mxu0
  %v486 = vadd.f32 0.0, %v485
  %487 = vmatprep.mubr.f32.mxu0 0.0
  %488 = vmatmul.mubr.f32.gmra.mrb[0].mxu0 %v379
  %v489 = vpop.f32.mrb[0].mxu0
  %v490 = vadd.f32 0.0, %v489
  %v491 = vpop.f32.mrb[0].mxu0
  %v492 = vadd.f32 0.0, %v491
  %493 = vdwg.mxu0
  %494 = vmatprep.subr.mxu0 %v160
  %495 = vmatpush1.msra.mxu0 %v159
  %496 = vmatprep.subr.mxu0 %v185
  %497 = vmatpush1.msra.mxu0 %v184
  %498 = vmatprep.subr.mxu0 %v214
  %499 = vmatpush1.msra.mxu0 %v213
  %500 = vmatprep.subr.mxu0 %v239
  %501 = vmatpush1.msra.mxu0 %v238
  %502 = vmatprep.subr.mxu0 %v14
  %503 = vmatpush1.msra.mxu0 %v13
  %504 = vmatprep.subr.mxu0 %v264
  %505 = vmatpush1.msra.mxu0 %v263
  %506 = vmatprep.subr.mxu0 %v293
  %507 = vmatpush1.msra.mxu0 %v292
  %508 = vmatprep.subr.mxu0 %v318
  %509 = vmatpush1.msra.mxu0 %v317
  %510 = vmatprep.subr.mxu0 %v347
  %511 = vmatpush1.msra.mxu0 %v346
  %512 = vmatprep.subr.mxu0 0.0
  %513 = vmatpush1.msra.mxu0 0.0
  %514 = vmatprep.subr.mxu0 0.0
  %515 = vmatpush1.msra.mxu0 0.0
  %516 = vmatprep.subr.mxu0 0.0
  %517 = vmatpush1.msra.mxu0 0.0
  %518 = vmatprep.subr.mxu0 0.0
  %519 = vmatpush1.msra.mxu0 0.0
  %520 = vmatprep.subr.mxu0 0.0
  %521 = vmatpush1.msra.mxu0 0.0
  %522 = vmatprep.subr.mxu0 0.0
  %523 = vmatpush1.msra.mxu0 0.0
  %524 = vmatprep.subr.mxu0 0.0
  %525 = vmatpush1.msra.mxu0 0.0
  %526 = vmatprep.subr.mxu0 0.0
  %527 = vmatpush1.msra.mxu0 0.0
  %528 = vmatprep.subr.mxu0 0.0
  %529 = vmatpush1.msra.mxu0 0.0
  %530 = vmatprep.subr.mxu0 0.0
  %531 = vmatpush1.msra.mxu0 0.0
  %532 = vmatprep.subr.mxu0 0.0
  %533 = vmatpush1.msra.mxu0 0.0
  %534 = vmatprep.subr.mxu0 0.0
  %535 = vmatpush1.msra.mxu0 0.0
  %536 = vmatprep.subr.mxu0 0.0
  %537 = vmatpush1.msra.mxu0 0.0
  %538 = vmatprep.subr.mxu0 0.0
  %539 = vmatpush1.msra.mxu0 0.0
  %540 = vmatprep.subr.mxu0 0.0
  %541 = vmatpush1.msra.mxu0 0.0
  %542 = vmatprep.subr.mxu0 0.0
  %543 = vmatpush1.msra.mxu0 0.0
  %544 = vmatprep.subr.mxu0 0.0
  %545 = vmatpush1.msra.mxu0 0.0
  %546 = vmatprep.subr.mxu0 0.0
  %547 = vmatpush1.msra.mxu0 0.0
  %548 = vmatprep.subr.mxu0 0.0
  %549 = vmatpush1.msra.mxu0 0.0
  %550 = vmatprep.subr.mxu0 0.0
  %551 = vmatpush1.msra.mxu0 0.0
  %552 = vmatprep.subr.mxu0 0.0
  %553 = vmatpush1.msra.mxu0 0.0
  %554 = vmatprep.subr.mxu0 0.0
  %555 = vmatpush1.msra.mxu0 0.0
  %556 = vmatprep.subr.mxu0 0.0
  %557 = vmatpush1.msra.mxu0 0.0
  %558 = vmatprep.mubr.f32.mxu0 0.0
  %559 = vmatmul.mubr.f32.gmra.mrb[0].mxu0 %v358
  %v560 = vpop.f32.mrb[0].mxu0
  %v561 = vadd.f32 0.0, %v560
  %v562 = vpop.f32.mrb[0].mxu0
  %v563 = vadd.f32 0.0, %v562
  %564 = vmatprep.mubr.f32.mxu0 0.0
  %565 = vmatmul.mubr.f32.gmra.mrb[0].mxu0 %v361
  %v566 = vpop.f32.mrb[0].mxu0
  %v567 = vadd.f32 0.0, %v566
  %v568 = vpop.f32.mrb[0].mxu0
  %v569 = vadd.f32 0.0, %v568
  %570 = vmatprep.mubr.f32.mxu0 0.0
  %571 = vmatmul.mubr.f32.gmra.mrb[0].mxu0 %v364
  %v572 = vpop.f32.mrb[0].mxu0
  %v573 = vadd.f32 0.0, %v572
  %v574 = vpop.f32.mrb[0].mxu0
  %v575 = vadd.f32 0.0, %v574
  %576 = vmatprep.mubr.f32.mxu0 0.0
  %577 = vmatmul.mubr.f32.gmra.mrb[0].mxu0 %v367
  %v578 = vpop.f32.mrb[0].mxu0
  %v579 = vadd.f32 0.0, %v578
  %v580 = vpop.f32.mrb[0].mxu0
  %v581 = vadd.f32 0.0, %v580
  %582 = vmatprep.mubr.f32.mxu0 0.0
  %583 = vmatmul.mubr.f32.gmra.mrb[0].mxu0 %v370
  %v584 = vpop.f32.mrb[0].mxu0
  %v585 = vadd.f32 0.0, %v584
  %v586 = vpop.f32.mrb[0].mxu0
  %v587 = vadd.f32 0.0, %v586
  %588 = vmatprep.mubr.f32.mxu0 0.0
  %589 = vmatmul.mubr.f32.gmra.mrb[0].mxu0 %v373
  %v590 = vpop.f32.mrb[0].mxu0
  %v591 = vadd.f32 0.0, %v590
  %v592 = vpop.f32.mrb[0].mxu0
  %v593 = vadd.f32 0.0, %v592
  %594 = vmatprep.mubr.f32.mxu0 0.0
  %595 = vmatmul.mubr.f32.gmra.mrb[0].mxu0 %v376
  %v596 = vpop.f32.mrb[0].mxu0
  %v597 = vadd.f32 0.0, %v596
  %v598 = vpop.f32.mrb[0].mxu0
  %v599 = vadd.f32 0.0, %v598
  %600 = vmatprep.mubr.f32.mxu0 0.0
  %601 = vmatmul.mubr.f32.gmra.mrb[0].mxu0 %v379
  %v602 = vpop.f32.mrb[0].mxu0
  %v603 = vadd.f32 0.0, %v602
  %v604 = vpop.f32.mrb[0].mxu0
  %v605 = vadd.f32 0.0, %v604
  %606 = vdwg.mxu0
  %v607 = vmax.f32 %v448, 0.0
  %v608 = vmax.f32 %v450, 0.0
  %v609 = vmax.f32 %v561, 0.0
  %v610 = vmax.f32 %v563, 0.0
  %v611 = vmax.f32 %v454, 0.0
  %v612 = vmax.f32 %v456, 0.0
  %v613 = vmax.f32 %v567, 0.0
  %v614 = vmax.f32 %v569, 0.0
  %v615 = vmax.f32 %v460, 0.0
  %v616 = vmax.f32 %v462, 0.0
  %v617 = vmax.f32 %v573, 0.0
  %v618 = vmax.f32 %v575, 0.0
  %v619 = vmax.f32 %v466, 0.0
  %v620 = vmax.f32 %v468, 0.0
  %v621 = vmax.f32 %v579, 0.0
  %v622 = vmax.f32 %v581, 0.0
  %v623 = vmax.f32 %v472, 0.0
  %v624 = vmax.f32 %v474, 0.0
  %v625 = vmax.f32 %v585, 0.0
  %v626 = vmax.f32 %v587, 0.0
  %v627 = vmax.f32 %v478, 0.0
  %v628 = vmax.f32 %v480, 0.0
  %v629 = vmax.f32 %v591, 0.0
  %v630 = vmax.f32 %v593, 0.0
  %v631 = vmax.f32 %v484, 0.0
  %v632 = vmax.f32 %v486, 0.0
  %v633 = vmax.f32 %v597, 0.0
  %v634 = vmax.f32 %v599, 0.0
  %v635 = vmax.f32 %v490, 0.0
  %v636 = vmax.f32 %v492, 0.0
  %v637 = vmax.f32 %v603, 0.0
  %v638 = vmax.f32 %v605, 0.0
  %639 = vst [vmem:[%s2] sm:$0xff] %v607
  %640 = vst [vmem:[%s2 + $0x8] sm:$0xff] %v608
  %641 = vst [vmem:[%s2 + $0x10] sm:$0xff] %v611
  %642 = vst [vmem:[%s2 + $0x18] sm:$0xff] %v612
  %643 = vst [vmem:[%s2 + $0x20] sm:$0xff] %v615
  %644 = vst [vmem:[%s2 + $0x28] sm:$0xff] %v616
  %645 = vst [vmem:[%s2 + $0x30] sm:$0xff] %v619
  %646 = vst [vmem:[%s2 + $0x38] sm:$0xff] %v620
  %647 = vst [vmem:[%s2 + $0x40] sm:$0xff] %v623
  %648 = vst [vmem:[%s2 + $0x48] sm:$0xff] %v624
  %649 = vst [vmem:[%s2 + $0x50] sm:$0xff] %v627
  %650 = vst [vmem:[%s2 + $0x58] sm:$0xff] %v628
  %651 = vst [vmem:[%s2 + $0x60] sm:$0xff] %v631
  %652 = vst [vmem:[%s2 + $0x68] sm:$0xff] %v632
  %653 = vst [vmem:[%s2 + $0x70] sm:$0xff] %v635
  %654 = vst [vmem:[%s2 + $0x78] sm:$0xff] %v636
  %s655 = scalar_lea.vmem %s2, 128
  %656 = vst [vmem:[%s655] sm:$0xff] %v609
  %657 = vst [vmem:[%s655 + $0x8] sm:$0xff] %v610
  %658 = vst [vmem:[%s655 + $0x10] sm:$0xff] %v613
  %659 = vst [vmem:[%s655 + $0x18] sm:$0xff] %v614
  %660 = vst [vmem:[%s655 + $0x20] sm:$0xff] %v617
  %661 = vst [vmem:[%s655 + $0x28] sm:$0xff] %v618
  %662 = vst [vmem:[%s655 + $0x30] sm:$0xff] %v621
  %663 = vst [vmem:[%s655 + $0x38] sm:$0xff] %v622
  %664 = vst [vmem:[%s655 + $0x40] sm:$0xff] %v625
  %665 = vst [vmem:[%s655 + $0x48] sm:$0xff] %v626
  %666 = vst [vmem:[%s655 + $0x50] sm:$0xff] %v629
  %667 = vst [vmem:[%s655 + $0x58] sm:$0xff] %v630
  %668 = vst [vmem:[%s655 + $0x60] sm:$0xff] %v633
  %669 = vst [vmem:[%s655 + $0x68] sm:$0xff] %v634
  %670 = vst [vmem:[%s655 + $0x70] sm:$0xff] %v637
  %671 = vst [vmem:[%s655 + $0x78] sm:$0xff] %v638
  // Predicated region
  $region10: #{inception_block.1} parent=0 // pred_check
    _
  $region11: #{inception_block.1} parent=0 // pred_check_branch
    %673 = sbr.rel (0) target = $region13
  $region12: #{inception_block.1} parent=0 // pred_region
    _
  $region13: #{inception_block.1} parent=0 // pred_fallthru
    _
  // Predicated region
  $region14: #{inception_block.1} parent=0 // pred_check
    _
  $region15: #{inception_block.1} parent=0 // pred_check_branch
    %675 = sbr.rel (0) target = $region17
  $region16: #{inception_block.1} parent=0 // pred_region
    _
  $region17: #{inception_block.1} parent=0 // pred_fallthru
    _

</llo_original>
